<compile_context>
chip_gen: v5e
topology: v5e:2x2
jax: 0.10.0
libtpu: 0.0.40
codegen_flags: <defaults>
</compile_context>

<pallas_src>
import math
from functools import lru_cache

import jax
import jax.numpy as jnp
import numpy as np
from jax.experimental import pallas as pl
from jax.experimental.pallas import tpu as pltpu


def _upsample_kernel(x_ref, w_ref, o_ref):
    # x_ref: (TM, L_in) row tile, w_ref: (L_in, L_out) grid-invariant weights,
    # o_ref: (TM, L_out) output tile.  Accumulate in f32, cast on store.
    x = x_ref[...].astype(jnp.float32)
    o_ref[...] = jnp.dot(
        x, w_ref[...], preferred_element_type=jnp.float32
    ).astype(o_ref.dtype)


@lru_cache(maxsize=None)
def _linear_interp_matrix(l_in: int, l_out: int):
    """(L_in, L_out) f32 matrix W s.t. out = x @ W reproduces
    F.interpolate(mode='linear', align_corners=True).  Banded: <=2 nnz/column.
    Built with numpy (no dense one_hot temporaries) and cached per shape."""
    w = np.zeros((l_in, l_out), dtype=np.float32)
    if l_out == 1 or l_in == 1:
        w[0, :] = 1.0
    else:
        coords = np.arange(l_out, dtype=np.float64) * (l_in - 1) / (l_out - 1)
        i0 = np.clip(np.floor(coords).astype(np.int64), 0, l_in - 1)
        i1 = np.clip(i0 + 1, 0, l_in - 1)
        w1 = (coords - i0).astype(np.float32)
        w0 = np.float32(1.0) - w1
        cols = np.arange(l_out)
        w[i0, cols] += w0
        w[i1, cols] += w1
    return jnp.asarray(w)


def _pick_row_tile(rows: int, l_in: int, l_out: int, itemsize: int) -> int:
    """Largest row tile whose double-buffered x/out tiles fit a ~12 MiB budget
    (keeps the whole pipeline, incl. W buffers, well inside v7x's 32 MiB scoped
    VMEM default; v5e/v6e have even more headroom)."""
    budget = 12 * 1024 * 1024
    bytes_per_row = (l_in + l_out) * itemsize
    tm = budget // max(1, 2 * bytes_per_row)
    tm = int(max(8, min(1024, tm)))
    tm -= tm % 8                      # second-minor block dim: multiple of 8
    if tm >= rows:
        return rows                   # full extent is always a legal block dim
    return tm


def upsample_block(x: jax.Array, scale_factor=2) -> jax.Array:
    """UpsampleBlock.forward: (N, C, L) -> (N, C, floor(L * scale_factor))."""
    n, c, l_in = x.shape
    # PyTorch floors the output size for non-integer scale factors.
    l_out = int(math.floor(l_in * scale_factor))

    rows = n * c
    x2d = x.reshape(rows, l_in)
    w = _linear_interp_matrix(l_in, l_out)          # always f32
    itemsize = int(x.dtype.itemsize)
    tm = _pick_row_tile(rows, l_in, l_out, max(itemsize, 4))
    num_row_blocks = pl.cdiv(rows, tm)

    # Explicit VMEM request: double-buffered x/out tiles + (possibly
    # double-buffered) W + 2x slack, clamped to be safe on v7x (64 MiB phys).
    vmem_bytes = 2 * tm * (l_in + l_out) * max(itemsize, 4) + 2 * l_in * l_out * 4
    vmem_bytes = int(min(max(2 * vmem_bytes, 16 * 1024 * 1024), 48 * 1024 * 1024))

    cost = pl.CostEstimate(
        flops=2 * rows * l_in * l_out,
        transcendentals=0,
        bytes_accessed=(rows * l_in + rows * l_out) * itemsize + l_in * l_out * 4,
    )

    out2d = pl.pallas_call(
        _upsample_kernel,
        out_shape=jax.ShapeDtypeStruct((rows, l_out), x.dtype),
        grid_spec=pltpu.PrefetchScalarGridSpec(
            num_scalar_prefetch=0,
            grid=(num_row_blocks,),
            in_specs=[
                pl.BlockSpec((tm, l_in), lambda i: (i, 0)),
                pl.BlockSpec((l_in, l_out), lambda i: (0, 0)),  # grid-invariant W
            ],
            out_specs=pl.BlockSpec((tm, l_out), lambda i: (i, 0)),
        ),
        compiler_params=pltpu.CompilerParams(
            dimension_semantics=("parallel",),   # shard row tiles across TCs (v7x)
            vmem_limit_bytes=vmem_bytes,
        ),
        cost_estimate=cost,
    )(x2d, w)

    return out2d.reshape(n, c, l_out)


def _reference_upsample(x: jax.Array, scale_factor=2) -> jax.Array:
    """Pure-JAX reference of F.interpolate(mode='linear', align_corners=True)."""
    n, c, l_in = x.shape
    l_out = int(math.floor(l_in * scale_factor))
    if l_out == 1:
        coords = jnp.zeros((1,), dtype=jnp.float32)
    else:
        coords = jnp.arange(l_out, dtype=jnp.float32) * (l_in - 1) / (l_out - 1)
    i0 = jnp.clip(jnp.floor(coords).astype(jnp.int32), 0, l_in - 1)
    i1 = jnp.clip(i0 + 1, 0, l_in - 1)
    w1 = coords - i0.astype(jnp.float32)
    w0 = 1.0 - w1
    x0 = x[..., i0].astype(jnp.float32)
    x1 = x[..., i1].astype(jnp.float32)
    return (x0 * w0 + x1 * w1).astype(x.dtype)


if __name__ == "__main__":
    key = jax.random.PRNGKey(0)
    # Small 3-D input consistent with 'linear' interpolation: (N, C, L)
    x = jax.random.normal(key, (2, 4, 16), dtype=jnp.float32)

    out = upsample_block(x, scale_factor=2)
    out = jax.block_until_ready(out)

    ref = _reference_upsample(x, scale_factor=2)
    assert out.shape == (2, 4, 32), out.shape
    assert jnp.allclose(out, ref, atol=1e-5, rtol=1e-5), "mismatch vs reference"

    print("KERNEL_OK")
</pallas_src>

<mosaic_0001>
module attributes {stable_mosaic.version = 11 : i64} {
  func.func @_upsample_kernel(%arg0: i32, %arg1: memref<8x16xf32, #tpu.memory_space<vmem>>, %arg2: memref<16x32xf32, #tpu.memory_space<vmem>>, %arg3: memref<8x32xf32, #tpu.memory_space<vmem>>) attributes {dimension_semantics = [#tpu.dimension_semantics<parallel>], iteration_bounds = array<i64: 1>, scalar_prefetch = 0 : i64, scratch_operands = 0 : i64, tpu.core_type = #tpu.core_type<tc>, window_params = [{transform_indices = @transform_0, window_bounds = array<i64: 8, 16>}, {pipeline_mode = #tpu.pipeline_mode<synchronous>, transform_indices = @transform_1, window_bounds = array<i64: 16, 32>}, {transform_indices = @transform_2, window_bounds = array<i64: 8, 32>}]} {
    %c0 = arith.constant 0 : index
    %c0_0 = arith.constant 0 : index
    %0 = vector.load %arg1[%c0, %c0_0] : memref<8x16xf32, #tpu.memory_space<vmem>>, vector<8x16xf32>
    %c0_1 = arith.constant 0 : index
    %c0_2 = arith.constant 0 : index
    %1 = vector.load %arg2[%c0_1, %c0_2] : memref<16x32xf32, #tpu.memory_space<vmem>>, vector<16x32xf32>
    %cst = arith.constant dense<0.000000e+00> : vector<8x32xf32>
    %2 = tpu.matmul %0, %1, %cst {dimension_numbers = #tpu.dot_dimension_numbers<[1], [0], [0], [1], [0, 0, 1, 1], [], []>} : vector<8x16xf32>, vector<16x32xf32>, vector<8x32xf32> -> vector<8x32xf32>
    %c0_3 = arith.constant 0 : index
    %c0_4 = arith.constant 0 : index
    %3 = vector.load %arg3[%c0_3, %c0_4] : memref<8x32xf32, #tpu.memory_space<vmem>>, vector<8x32xf32>
    tpu.vector_store %arg3[%c0_3, %c0_4], %2 {strides = array<i32>} : memref<8x32xf32, #tpu.memory_space<vmem>>, vector<8x32xf32>,
    return
  }
  func.func @transform_0(%arg0: i32) -> (i32, i32) {
    %c0_i32 = arith.constant 0 : i32
    %c0_i32_0 = arith.constant 0 : i32
    return %arg0, %c0_i32 : i32, i32
  }
  func.func @transform_1(%arg0: i32) -> (i32, i32) {
    %c0_i32 = arith.constant 0 : i32
    %c0_i32_0 = arith.constant 0 : i32
    %c0_i32_1 = arith.constant 0 : i32
    return %c0_i32, %c0_i32_0 : i32, i32
  }
  func.func @transform_2(%arg0: i32) -> (i32, i32) {
    %c0_i32 = arith.constant 0 : i32
    %c0_i32_0 = arith.constant 0 : i32
    return %arg0, %c0_i32 : i32, i32
  }
}

</mosaic_0001>

<llo_original>
// kernel: tpu_custom_call.1
$region0: #{tpu_custom_call.1}
  #allocation0 [shape = 'u32[]', space=smem, size = 0x4, offset = 0x4, fixed_abs, tag = 'smem constant byte address 0x4 - core index']
  #allocation1 [shape = 'u32[72,128]{1,0:T(1,128)}', space=vmem, size = 0x9000, scoped, tag = 'internal scratch']
  %s0 = inlined_call_operand.hbm [shape: f32[8,16], index: 0, kind: input, shape index: {}]
  %s1 = inlined_call_operand.hbm [shape: f32[16,32], index: 1, kind: input, shape index: {}]
  %s2 = inlined_call_operand.hbm [shape: f32[8,32], index: 2, kind: output, shape index: {}]
  %s3 = sld [smem:[#allocation0]]
  $region26: #{tpu_custom_call.1} parent=0
    _
  %s5 = ssub.s32 1, %s3
  %s6 = scalar_select 0, %s5, %s3
  $region1: #{tpu_custom_call.1} parent=0
    #allocation2 [shape = 'u8[4096]{0}', space=vmem, size = 0x1000, scoped, tag = 'input window, operand 0, single buffered']
    #allocation3 [shape = 's32[1]{0}', space=sflag, size = 0x4, scoped, tag = 'scoped memory for tpu_custom_call.1']
    #allocation4 [shape = 's32[1]{0}', space=sflag, size = 0x4, scoped, tag = 'scoped memory for tpu_custom_call.1']
    #allocation5 [shape = 'u8[8192]{0}', space=vmem, size = 0x2000, scoped, tag = 'input window, operand 1, single buffered']
    #allocation6 [shape = 's32[1]{0}', space=sflag, size = 0x4, scoped, tag = 'scoped memory for tpu_custom_call.1']
    #allocation7 [shape = 'u8[4096]{0}', space=vmem, size = 0x1000, scoped, tag = 'output window, operand 0, single buffered']
    %7 = vsyncpa [#allocation3], 0
    %8 = vsyncpa [#allocation6], 0
    %9 = vsyncpa [#allocation4], 0
    // Predicated region
    $region2: #{tpu_custom_call.1} parent=1 // pred_check
      _
    $region3: #{tpu_custom_call.1} parent=1 // pred_check_branch
      %11 = sbr.rel (0) target = $region5
    $region4: #{tpu_custom_call.1} parent=1 // pred_region
      %13 = vsyncadd [#allocation3], 0
      %s15 = sshll.u32 %s0, 4
      %s16 = int_to_ptr.hbm [resolvable:$true] %s15
      %s17 = sshll.u32 [#allocation2], 4
      %s18 = int_to_ptr.vmem [resolvable:$true] %s17
      %20 = dma.hbm_to_vmem [thread:$0]  %s16, 128, %s18, [#allocation3]
    $region5: #{tpu_custom_call.1} parent=1 // pred_fallthru
      _
    // Predicated region
    $region6: #{tpu_custom_call.1} parent=1 // pred_check
      _
    $region7: #{tpu_custom_call.1} parent=1 // pred_check_branch
      %22 = sbr.rel (0) target = $region9
    $region8: #{tpu_custom_call.1} parent=1 // pred_region
      %24 = vsyncadd [#allocation6], 0
      %s25 = sshll.u32 %s1, 4
      %s26 = int_to_ptr.hbm [resolvable:$true] %s25
      %s27 = sshll.u32 [#allocation5], 4
      %s28 = int_to_ptr.vmem [resolvable:$true] %s27
      %33 = dma.hbm_to_vmem [thread:$0]  %s26, 256, %s28, [#allocation6], 128, 128, 8
    $region9: #{tpu_custom_call.1} parent=1 // pred_fallthru
      _
    // Predicated region
    $region10: #{tpu_custom_call.1} parent=1 // pred_check
      _
    $region11: #{tpu_custom_call.1} parent=1 // pred_check_branch
      %35 = sbr.rel (0) target = $region13
    $region12: #{tpu_custom_call.1} parent=1 // pred_region
      %37 = dma.done [#allocation3], 128
    $region13: #{tpu_custom_call.1} parent=1 // pred_fallthru
      _
    // Predicated region
    $region14: #{tpu_custom_call.1} parent=1 // pred_check
      _
    $region15: #{tpu_custom_call.1} parent=1 // pred_check_branch
      %39 = sbr.rel (0) target = $region17
    $region16: #{tpu_custom_call.1} parent=1 // pred_region
      %41 = dma.done [#allocation6], 256
    $region17: #{tpu_custom_call.1} parent=1 // pred_fallthru
      _
    %v42 = vld [vmem:[#allocation2] sm:$0xff]
    %v43 = vld [vmem:[#allocation5] sm:$0xff]
    %v44 = vld [vmem:[#allocation5 + $0x8] sm:$0xff]
    %vm45 = vcmask 130048
    %v47 = vsel %vm45, %v42, 0
    %49 = vmatpush.msra.mxu0 0.0
    %50 = vmatpush.msra.mxu0 0.0
    %51 = vmatpush.msra.mxu0 0.0
    %52 = vmatpush.msra.mxu0 0.0
    %53 = vmatpush.msra.mxu0 0.0
    %54 = vmatpush.msra.mxu0 0.0
    %55 = vmatpush.msra.mxu0 0.0
    %56 = vmatpush.msra.mxu0 0.0
    %57 = vmatpush.msra.mxu0 0.0
    %58 = vmatpush.msra.mxu0 0.0
    %59 = vmatpush.msra.mxu0 0.0
    %60 = vmatpush.msra.mxu0 0.0
    %61 = vmatpush.msra.mxu0 0.0
    %62 = vmatpush.msra.mxu0 0.0
    %63 = vmatpush.msra.mxu0 %v44
    %64 = vmatpush.msra.mxu0 %v43
    %65 = vmatmul.f32.gmra.mxu0 %v47
    %v66 = vpop.f32.mrf.mxu0
    %v67 = vadd.f32 0.0, %v66
    %68 = vdwg.mxu0
    %vm69 = vcmask 261120
    %70 = vst.msk [vmem:[#allocation7] sm:$0xff] %vm69, %v67
    // Predicated region
    $region18: #{tpu_custom_call.1} parent=1 // pred_check
      _
    $region19: #{tpu_custom_call.1} parent=1 // pred_check_branch
      %72 = sbr.rel (0) target = $region21
    $region20: #{tpu_custom_call.1} parent=1 // pred_region
      %74 = vsyncadd [#allocation4], 0
      %s76 = sshll.u32 [#allocation7], 4
      %s77 = int_to_ptr.vmem [resolvable:$true] %s76
      %s78 = sshll.u32 %s2, 4
      %s79 = int_to_ptr.hbm [resolvable:$true] %s78
      %81 = dma.vmem_to_hbm [thread:$0]  %s77, 128, %s79, [#allocation4]
    $region21: #{tpu_custom_call.1} parent=1 // pred_fallthru
      _
    // Predicated region
    $region22: #{tpu_custom_call.1} parent=1 // pred_check
      _
    $region23: #{tpu_custom_call.1} parent=1 // pred_check_branch
      %83 = sbr.rel (0) target = $region25
    $region24: #{tpu_custom_call.1} parent=1 // pred_region
      %85 = dma.done [#allocation4], 128
    $region25: #{tpu_custom_call.1} parent=1 // pred_fallthru
      _
    %86 = vsyncpa [#allocation3], 1
    %87 = vsyncpa [#allocation6], 1
    %88 = vsyncpa [#allocation4], 1

</llo_original>
